<compile_context>
chip_gen: v5e
topology: v5e:2x2
jax: 0.10.0
libtpu: 0.0.40
codegen_flags: <defaults>
</compile_context>

<pallas_src>
import math
import functools

import jax
import jax.numpy as jnp
from jax.experimental import pallas as pl
from jax.experimental.pallas import tpu as pltpu

LN_EPS = 1e-5


def _layernorm(h, gamma, beta):
    mu = jnp.mean(h, axis=-1, keepdims=True)
    var = jnp.mean((h - mu) ** 2, axis=-1, keepdims=True)
    return (h - mu) * jax.lax.rsqrt(var + LN_EPS) * gamma + beta


def _spec(shape, index_map, nbuf=None):
    """BlockSpec with optional explicit buffer depth (Buffered(1) = resident)."""
    if nbuf is None:
        return pl.BlockSpec(shape, index_map)
    return pl.BlockSpec(shape, index_map, pipeline_mode=pl.Buffered(nbuf))


def _nbytes(shape, dtype):
    n = 2 if dtype == jnp.bfloat16 else 4
    for d in shape:
        n *= int(d)
    return n


def _vmem_capacity_bytes():
    try:
        cap = getattr(pltpu.get_tpu_info(), "vmem_capacity_bytes", None)
        if cap:
            return int(cap)
    except Exception:
        pass
    return 64 * 2 ** 20   # conservative default: v7x per-core VMEM


# --------------------------------------------------------------------------- #
# Kernel 1: LN1 + fused QKV projection (the QuantizeLinearSwitchable linears). #
# Hoisted out of the flash loop so each row is projected exactly once.        #
# --------------------------------------------------------------------------- #
def qkv_proj_kernel(x_ref, g_ref, b_ref, w_ref, bias_ref, out_ref):
    h = _layernorm(x_ref[0], g_ref[...], b_ref[...])
    # TODO(synk): fake-quantize h / w_ref here once QuantizeLinear's body exists.
    y = jnp.dot(h.astype(w_ref.dtype), w_ref[...],
                preferred_element_type=jnp.float32) + bias_ref[...]
    out_ref[0] = y.astype(out_ref.dtype)


# --------------------------------------------------------------------------- #
# Kernel 2: flash attention (online softmax) + out-proj + residual + LN2 + MLP #
# --------------------------------------------------------------------------- #
def flash_block_kernel(exact_recip,
                       x_ref, q_ref, kT_ref, v_ref, mask_ref,
                       wo_ref, bo_ref, ln2_g_ref, ln2_b_ref,
                       w1_ref, b1_ref, w2_ref, b2_ref,
                       out_ref,
                       m_scr, l_scr, acc_scr):
    ki = pl.program_id(2)

    @pl.when(ki == 0)
    def _init():
        m_scr[...] = jnp.full(m_scr.shape, -jnp.inf, dtype=m_scr.dtype)
        l_scr[...] = jnp.zeros(l_scr.shape, dtype=l_scr.dtype)
        acc_scr[...] = jnp.zeros(acc_scr.shape, dtype=acc_scr.dtype)

    q = q_ref[0]     # (H, tq, D), 1/sqrt(D) already folded into the projection
    kT = kT_ref[0]   # (H, D, tk), pre-transposed per head (MXU-natural layout)
    v = v_ref[0]     # (H, tk, D)

    # scores: per-head (tq,D)x(D,tk) — contraction already in MXU layout.
    s = jnp.einsum('hqd,hdk->hqk', q, kT, preferred_element_type=jnp.float32)
    s = s + mask_ref[0]                               # additive padding mask (1,1,tk)
    # TODO(synk): scalar-prefetch per-(b,ki) flags to skip fully-masked/unmasked
    # KV tiles (and causal-skip) with no numerical change.

    m_prev = m_scr[...]
    m_new = jnp.maximum(m_prev, jnp.max(s, axis=-1, keepdims=True))
    alpha = jnp.exp(m_prev - m_new)
    p = jnp.exp(s - m_new)
    l_scr[...] = alpha * l_scr[...] + jnp.sum(p, axis=-1, keepdims=True)
    acc_scr[...] = alpha * acc_scr[...] + jnp.einsum(
        'hqk,hkd->hqd', p.astype(v.dtype), v, preferred_element_type=jnp.float32)
    m_scr[...] = m_new

    @pl.when(ki == pl.num_programs(2) - 1)
    def _finalize():
        if exact_recip:                                   # bit-parity path
            attn_h = acc_scr[...] / l_scr[...]
        else:                                             # perf path: EUP reciprocal
            attn_h = acc_scr[...] * pl.reciprocal(l_scr[...], approx=True)
        # Head merge folded into the out-projection (wo reshaped to (H, D, E)):
        o = jnp.einsum('hqd,hde->hqe', attn_h.astype(wo_ref.dtype), wo_ref[...],
                       preferred_element_type=jnp.float32)
        attn = jnp.sum(o, axis=0) + bo_ref[...]           # (tq, E)
        h1 = x_ref[0] + attn
        h2 = _layernorm(h1, ln2_g_ref[...], ln2_b_ref[...])
        m1 = jnp.dot(h2.astype(w1_ref.dtype), w1_ref[...],
                     preferred_element_type=jnp.float32) + b1_ref[...]
        m1 = jax.nn.gelu(m1, approximate=False)
        m2 = jnp.dot(m1.astype(w2_ref.dtype), w2_ref[...],
                     preferred_element_type=jnp.float32) + b2_ref[...]
        out_ref[0] = h1 + m2


def gpt2_quant_block(x, attention_mask, params, num_heads,
                     tq=None, tk=None, use_bf16=False):
    B, S, E = x.shape
    I = params["w1"].shape[1]
    H = num_heads
    assert E % H == 0
    D = E // H
    assert attention_mask.shape == (B, S)

    cap = _vmem_capacity_bytes()
    if tq is None:
        # 256 fills the 2x256x256 MXU on v6e (128 MiB VMEM) and, with bf16 weights,
        # on v7x (64 MiB). v5e (4x128x128 MXU) should pass tq=tk=128 explicitly.
        tq = min(S, 256 if (cap >= 96 * 2 ** 20 or use_bf16) else 128)
    if tk is None:
        tk = tq
    assert S % tq == 0 and S % tk == 0, "S must be divisible by the sequence tiles"
    assert tq % 8 == 0 and tk % 8 == 0, "sequence tiles must be sublane (8) aligned"
    n_q, n_kv = S // tq, S // tk

    w_dtype = jnp.bfloat16 if use_bf16 else jnp.float32
    act_dtype = jnp.bfloat16 if use_bf16 else jnp.float32

    # Fused q/k/v weight & bias; fold the 1/sqrt(D) scale into the q columns so it
    # is applied exactly once at projection time.
    scale = 1.0 / math.sqrt(D)
    wqkv = jnp.concatenate(
        [params["wq"] * scale, params["wk"], params["wv"]], axis=1).astype(w_dtype)
    bqkv = jnp.concatenate(
        [params["bq"] * scale, params["bk"], params["bv"]], axis=1).astype(jnp.float32)
    wo_h = params["wo"].reshape(H, D, E).astype(w_dtype)   # head-major out-proj weight
    w1 = params["w1"].astype(w_dtype)
    w2 = params["w2"].astype(w_dtype)

    # Additive padding mask, pre-tiled along KV so each block is lane-dense (tk last).
    mask_add = ((1.0 - attention_mask.astype(jnp.float32)) * (-10000.0)
                ).reshape(B, n_kv, 1, tk)

    def _limit(entries):
        est = sum(n * _nbytes(s, d) for s, d, n in entries)
        return int(min(max(2 * est, 32 * 2 ** 20), cap - 8 * 2 ** 20))

    def _run(pipelined):
        wn = 1 if pipelined else None    # grid-constant weights: single-buffered
        kn = 3 if pipelined else None    # KV-streaming operands: 3-deep pipeline
        wn_i = 1 if pipelined else 2
        kn_i = 3 if pipelined else 2

        # ---- stage 1: LN1 + fused QKV projection (each row touched once) ----
        proj_limit = _limit([
            ((1, tq, E), jnp.float32, 2), ((1, E), jnp.float32, 2),
            ((1, E), jnp.float32, 2), ((E, 3 * E), w_dtype, wn_i),
            ((1, 3 * E), jnp.float32, wn_i), ((1, tq, 3 * E), act_dtype, 2)])
        qkv = pl.pallas_call(
            qkv_proj_kernel,
            out_shape=jax.ShapeDtypeStruct((B, S, 3 * E), act_dtype),
            grid_spec=pltpu.PrefetchScalarGridSpec(
                num_scalar_prefetch=0,
                grid=(B, n_q),
                in_specs=[
                    pl.BlockSpec((1, tq, E), lambda b, si: (b, si, 0)),
                    _spec((1, E), lambda b, si: (0, 0), wn),
                    _spec((1, E), lambda b, si: (0, 0), wn),
                    _spec((E, 3 * E), lambda b, si: (0, 0), wn),
                    _spec((1, 3 * E), lambda b, si: (0, 0), wn),
                ],
                out_specs=pl.BlockSpec((1, tq, 3 * E), lambda b, si: (b, si, 0)),
            ),
            compiler_params=pltpu.CompilerParams(
                dimension_semantics=("parallel", "parallel"),
                vmem_limit_bytes=proj_limit),
        )(x, params["ln1_g"], params["ln1_b"], wqkv, bqkv)

        # One-time XLA layout plumbing: head-split q/v and pre-transpose K so the
        # in-kernel scores matmul needs no XLU transpose and no per-head concat.
        q, k, v = jnp.split(qkv, 3, axis=-1)
        q = q.reshape(B, S, H, D).transpose(0, 2, 1, 3)                    # (B,H,S,D)
        v = v.reshape(B, S, H, D).transpose(0, 2, 1, 3)                    # (B,H,S,D)
        kT = (k.reshape(B, n_kv, tk, H, D)
               .transpose(0, 1, 3, 4, 2)
               .reshape(B * n_kv, H, D, tk))                               # (B*nkv,H,D,tk)

        # ---- stage 2: flash attention + out-proj + residual + LN2 + MLP ----
        flash_limit = _limit([
            ((1, tq, E), jnp.float32, 2), ((1, H, tq, D), act_dtype, 2),
            ((1, H, D, tk), act_dtype, kn_i), ((1, H, tk, D), act_dtype, kn_i),
            ((1, 1, 1, tk), jnp.float32, kn_i),
            ((H, D, E), w_dtype, wn_i), ((1, E), jnp.float32, wn_i),
            ((1, E), jnp.float32, wn_i), ((1, E), jnp.float32, wn_i),
            ((E, I), w_dtype, wn_i), ((1, I), jnp.float32, wn_i),
            ((I, E), w_dtype, wn_i), ((1, E), jnp.float32, wn_i),
            ((1, tq, E), jnp.float32, 2),
            ((H, tq, 1), jnp.float32, 1), ((H, tq, 1), jnp.float32, 1),
            ((H, tq, D), jnp.float32, 1)])

        in_specs = [
            pl.BlockSpec((1, tq, E), lambda b, qi, ki: (b, qi, 0)),          # x residual
            pl.BlockSpec((1, H, tq, D), lambda b, qi, ki: (b, 0, qi, 0)),    # q
            _spec((1, H, D, tk), lambda b, qi, ki: (b * n_kv + ki, 0, 0, 0), kn),  # k^T
            _spec((1, H, tk, D), lambda b, qi, ki: (b, 0, ki, 0), kn),       # v
            _spec((1, 1, 1, tk), lambda b, qi, ki: (b, ki, 0, 0), kn),       # mask
            _spec((H, D, E), lambda b, qi, ki: (0, 0, 0), wn),               # wo (head-major)
            _spec((1, E), lambda b, qi, ki: (0, 0), wn),                     # bo
            _spec((1, E), lambda b, qi, ki: (0, 0), wn),                     # ln2_g
            _spec((1, E), lambda b, qi, ki: (0, 0), wn),                     # ln2_b
            _spec((E, I), lambda b, qi, ki: (0, 0), wn),                     # w1
            _spec((1, I), lambda b, qi, ki: (0, 0), wn),                     # b1
            _spec((I, E), lambda b, qi, ki: (0, 0), wn),                     # w2
            _spec((1, E), lambda b, qi, ki: (0, 0), wn),                     # b2
        ]
        out_spec = pl.BlockSpec((1, tq, E), lambda b, qi, ki: (b, qi, 0))

        kernel = functools.partial(flash_block_kernel, not use_bf16)
        return pl.pallas_call(
            kernel,
            out_shape=jax.ShapeDtypeStruct((B, S, E), jnp.float32),
            grid_spec=pltpu.PrefetchScalarGridSpec(
                num_scalar_prefetch=0,
                grid=(B, n_q, n_kv),
                in_specs=in_specs,
                out_specs=out_spec,
                scratch_shapes=[
                    pltpu.VMEM((H, tq, 1), jnp.float32),   # running max
                    pltpu.VMEM((H, tq, 1), jnp.float32),   # running denominator
                    pltpu.VMEM((H, tq, D), jnp.float32),   # running numerator
                ]),
            compiler_params=pltpu.CompilerParams(
                dimension_semantics=("parallel", "parallel", "arbitrary"),
                vmem_limit_bytes=flash_limit),
        )(x, q, kT, v, mask_add,
          wo_h, params["bo"], params["ln2_g"], params["ln2_b"],
          w1, params["b1"], w2, params["b2"])

    try:
        return _run(pipelined=True)
    except Exception:
        # TODO(synk): remove fallback once pipeline_mode=pl.Buffered(...) is
        # confirmed on the deployment jax version; semantics are identical
        # (default double-buffering), only VMEM residency differs.
        return _run(pipelined=False)


def reference_block(x, attention_mask, params, num_heads):
    """Pure-JAX reference for correctness checking."""
    B, S, E = x.shape
    D = E // num_heads
    h = _layernorm(x, params["ln1_g"], params["ln1_b"])
    q = h @ params["wq"] + params["bq"]
    k = h @ params["wk"] + params["bk"]
    v = h @ params["wv"] + params["bv"]

    def shape(t):
        return t.reshape(B, S, num_heads, D).transpose(0, 2, 1, 3)
    q, k, v = shape(q), shape(k), shape(v)
    scores = jnp.einsum("bhqd,bhkd->bhqk", q, k) / math.sqrt(D)
    mask = attention_mask.reshape(B, 1, 1, S)
    scores = scores + (1.0 - mask) * (-10000.0)
    p = jax.nn.softmax(scores, axis=-1)
    o = jnp.einsum("bhqk,bhkd->bhqd", p, v).transpose(0, 2, 1, 3).reshape(B, S, E)
    o = o @ params["wo"] + params["bo"]
    h1 = x + o
    h2 = _layernorm(h1, params["ln2_g"], params["ln2_b"])
    m = jax.nn.gelu(h2 @ params["w1"] + params["b1"], approximate=False)
    m = m @ params["w2"] + params["b2"]
    return h1 + m


if __name__ == "__main__":
    # Small GPT2-like sizes: n_embd=32, n_head=4, n_inner=128, seq=16, batch=2.
    # tq=tk=8 -> flash grid (2, 2, 2) so both query tiling and the online-softmax
    # accumulation across multiple KV tiles are exercised.
    B, S, E, H = 2, 16, 32, 4
    I = 4 * E

    key = jax.random.PRNGKey(0)
    keys = jax.random.split(key, 16)
    scale = 0.05
    params = {
        "ln1_g": jnp.ones((1, E), jnp.float32),
        "ln1_b": jnp.zeros((1, E), jnp.float32),
        "wq": scale * jax.random.normal(keys[0], (E, E), jnp.float32),
        "bq": scale * jax.random.normal(keys[1], (1, E), jnp.float32),
        "wk": scale * jax.random.normal(keys[2], (E, E), jnp.float32),
        "bk": scale * jax.random.normal(keys[3], (1, E), jnp.float32),
        "wv": scale * jax.random.normal(keys[4], (E, E), jnp.float32),
        "bv": scale * jax.random.normal(keys[5], (1, E), jnp.float32),
        "wo": scale * jax.random.normal(keys[6], (E, E), jnp.float32),
        "bo": scale * jax.random.normal(keys[7], (1, E), jnp.float32),
        "ln2_g": jnp.ones((1, E), jnp.float32),
        "ln2_b": jnp.zeros((1, E), jnp.float32),
        "w1": scale * jax.random.normal(keys[8], (E, I), jnp.float32),
        "b1": scale * jax.random.normal(keys[9], (1, I), jnp.float32),
        "w2": scale * jax.random.normal(keys[10], (I, E), jnp.float32),
        "b2": scale * jax.random.normal(keys[11], (1, E), jnp.float32),
    }

    x = jax.random.normal(keys[12], (B, S, E), jnp.float32)
    # attention mask: 1 = attend, 0 = masked (last two positions of batch 1 masked)
    attention_mask = jnp.ones((B, S), jnp.float32).at[1, -2:].set(0.0)

    ref = reference_block(x, attention_mask, params, num_heads=H)

    # f32 parity path
    out = gpt2_quant_block(x, attention_mask, params, num_heads=H, tq=8, tk=8)
    out = jax.block_until_ready(out)
    assert out.shape == (B, S, E)
    assert jnp.allclose(out, ref, atol=2e-4, rtol=2e-4), "f32 mismatch vs reference"

    # bf16 perf path (bf16 weights / activations, f32 accumulation + softmax math)
    out_bf16 = gpt2_quant_block(x, attention_mask, params, num_heads=H,
                                tq=8, tk=8, use_bf16=True)
    out_bf16 = jax.block_until_ready(out_bf16)
    assert jnp.all(jnp.isfinite(out_bf16))
    assert jnp.allclose(out_bf16, ref, atol=5e-2, rtol=5e-2), "bf16 mismatch vs reference"

    print("KERNEL_OK")
</pallas_src>

<mosaic_0001>
module attributes {stable_mosaic.version = 11 : i64} {
  func.func @qkv_proj_kernel(%arg0: i32, %arg1: i32, %arg2: memref<1x8x32xf32, #tpu.memory_space<vmem>>, %arg3: memref<1x32xf32, #tpu.memory_space<vmem>>, %arg4: memref<1x32xf32, #tpu.memory_space<vmem>>, %arg5: memref<32x96xf32, #tpu.memory_space<vmem>>, %arg6: memref<1x96xf32, #tpu.memory_space<vmem>>, %arg7: memref<1x8x96xf32, #tpu.memory_space<vmem>>) attributes {dimension_semantics = [#tpu.dimension_semantics<parallel>, #tpu.dimension_semantics<parallel>], iteration_bounds = array<i64: 2, 2>, scalar_prefetch = 0 : i64, scratch_operands = 0 : i64, tpu.core_type = #tpu.core_type<tc>, window_params = [{transform_indices = @transform_0, window_bounds = array<i64: 1, 8, 32>}, {pipeline_mode = #tpu.pipeline_mode<synchronous>, transform_indices = @transform_1, window_bounds = array<i64: 1, 32>}, {pipeline_mode = #tpu.pipeline_mode<synchronous>, transform_indices = @transform_2, window_bounds = array<i64: 1, 32>}, {pipeline_mode = #tpu.pipeline_mode<synchronous>, transform_indices = @transform_3, window_bounds = array<i64: 32, 96>}, {pipeline_mode = #tpu.pipeline_mode<synchronous>, transform_indices = @transform_4, window_bounds = array<i64: 1, 96>}, {transform_indices = @transform_5, window_bounds = array<i64: 1, 8, 96>}]} {
    %c0 = arith.constant 0 : index
    %c0_0 = arith.constant 0 : index
    %c0_1 = arith.constant 0 : index
    %0 = vector.load %arg2[%c0, %c0_0, %c0_1] : memref<1x8x32xf32, #tpu.memory_space<vmem>>, vector<1x8x32xf32>
    %1 = vector.shape_cast %0 : vector<1x8x32xf32> to vector<8x32xf32>
    %c0_2 = arith.constant 0 : index
    %c0_3 = arith.constant 0 : index
    %2 = vector.load %arg3[%c0_2, %c0_3] : memref<1x32xf32, #tpu.memory_space<vmem>>, vector<1x32xf32>
    %c0_4 = arith.constant 0 : index
    %c0_5 = arith.constant 0 : index
    %3 = vector.load %arg4[%c0_4, %c0_5] : memref<1x32xf32, #tpu.memory_space<vmem>>, vector<1x32xf32>
    %cst = arith.constant dense<0.000000e+00> : vector<8xf32>
    %4 = vector.multi_reduction <add>, %1, %cst [1] : vector<8x32xf32> to vector<8xf32>
    %5 = vector.shape_cast %4 : vector<8xf32> to vector<8x1xf32>
    %cst_6 = arith.constant 3.200000e+01 : f32
    %6 = vector.broadcast %cst_6 : f32 to vector<8x1xf32>
    %7 = arith.divf %5, %6 : vector<8x1xf32>
    %8 = vector.broadcast %7 : vector<8x1xf32> to vector<8x32xf32>
    %9 = arith.subf %1, %8 : vector<8x32xf32>
    %10 = arith.mulf %9, %9 : vector<8x32xf32>
    %cst_7 = arith.constant dense<0.000000e+00> : vector<8xf32>
    %11 = vector.multi_reduction <add>, %10, %cst_7 [1] : vector<8x32xf32> to vector<8xf32>
    %12 = vector.shape_cast %11 : vector<8xf32> to vector<8x1xf32>
    %cst_8 = arith.constant 3.200000e+01 : f32
    %13 = vector.broadcast %cst_8 : f32 to vector<8x1xf32>
    %14 = arith.divf %12, %13 : vector<8x1xf32>
    %15 = vector.broadcast %7 : vector<8x1xf32> to vector<8x32xf32>
    %16 = arith.subf %1, %15 : vector<8x32xf32>
    %cst_9 = arith.constant 9.99999974E-6 : f32
    %17 = vector.broadcast %cst_9 : f32 to vector<8x1xf32>
    %18 = arith.addf %14, %17 : vector<8x1xf32>
    %19 = math.rsqrt %18 : vector<8x1xf32>
    %20 = vector.broadcast %19 : vector<8x1xf32> to vector<8x32xf32>
    %21 = arith.mulf %16, %20 : vector<8x32xf32>
    %22 = vector.broadcast %2 : vector<1x32xf32> to vector<8x32xf32>
    %23 = arith.mulf %21, %22 : vector<8x32xf32>
    %24 = vector.broadcast %3 : vector<1x32xf32> to vector<8x32xf32>
    %25 = arith.addf %23, %24 : vector<8x32xf32>
    %c0_10 = arith.constant 0 : index
    %c0_11 = arith.constant 0 : index
    %26 = vector.load %arg5[%c0_10, %c0_11] : memref<32x96xf32, #tpu.memory_space<vmem>>, vector<32x96xf32>
    %cst_12 = arith.constant dense<0.000000e+00> : vector<8x96xf32>
    %27 = tpu.matmul %25, %26, %cst_12 {dimension_numbers = #tpu.dot_dimension_numbers<[1], [0], [0], [1], [0, 0, 1, 1], [], []>} : vector<8x32xf32>, vector<32x96xf32>, vector<8x96xf32> -> vector<8x96xf32>
    %c0_13 = arith.constant 0 : index
    %c0_14 = arith.constant 0 : index
    %28 = vector.load %arg6[%c0_13, %c0_14] : memref<1x96xf32, #tpu.memory_space<vmem>>, vector<1x96xf32>
    %29 = vector.broadcast %28 : vector<1x96xf32> to vector<8x96xf32>
    %30 = arith.addf %27, %29 : vector<8x96xf32>
    %c0_15 = arith.constant 0 : index
    %c0_16 = arith.constant 0 : index
    %c0_17 = arith.constant 0 : index
    %31 = vector.load %arg7[%c0_15, %c0_16, %c0_17] : memref<1x8x96xf32, #tpu.memory_space<vmem>>, vector<1x8x96xf32>
    %32 = vector.shape_cast %31 : vector<1x8x96xf32> to vector<8x96xf32>
    %33 = vector.shape_cast %30 : vector<8x96xf32> to vector<1x8x96xf32>
    tpu.vector_store %arg7[%c0_15, %c0_16, %c0_17], %33 {strides = array<i32>} : memref<1x8x96xf32, #tpu.memory_space<vmem>>, vector<1x8x96xf32>,
    return
  }
  func.func @transform_0(%arg0: i32, %arg1: i32) -> (i32, i32, i32) {
    %c0_i32 = arith.constant 0 : i32
    %c0_i32_0 = arith.constant 0 : i32
    return %arg0, %arg1, %c0_i32 : i32, i32, i32
  }
  func.func @transform_1(%arg0: i32, %arg1: i32) -> (i32, i32) {
    %c0_i32 = arith.constant 0 : i32
    %c0_i32_0 = arith.constant 0 : i32
    %c0_i32_1 = arith.constant 0 : i32
    return %c0_i32, %c0_i32_0 : i32, i32
  }
  func.func @transform_2(%arg0: i32, %arg1: i32) -> (i32, i32) {
    %c0_i32 = arith.constant 0 : i32
    %c0_i32_0 = arith.constant 0 : i32
    %c0_i32_1 = arith.constant 0 : i32
    return %c0_i32, %c0_i32_0 : i32, i32
  }
  func.func @transform_3(%arg0: i32, %arg1: i32) -> (i32, i32) {
    %c0_i32 = arith.constant 0 : i32
    %c0_i32_0 = arith.constant 0 : i32
    %c0_i32_1 = arith.constant 0 : i32
    return %c0_i32, %c0_i32_0 : i32, i32
  }
  func.func @transform_4(%arg0: i32, %arg1: i32) -> (i32, i32) {
    %c0_i32 = arith.constant 0 : i32
    %c0_i32_0 = arith.constant 0 : i32
    %c0_i32_1 = arith.constant 0 : i32
    return %c0_i32, %c0_i32_0 : i32, i32
  }
  func.func @transform_5(%arg0: i32, %arg1: i32) -> (i32, i32, i32) {
    %c0_i32 = arith.constant 0 : i32
    %c0_i32_0 = arith.constant 0 : i32
    return %arg0, %arg1, %c0_i32 : i32, i32, i32
  }
}

module attributes {stable_mosaic.version = 11 : i64} {
  func.func @qkv_proj_kernel(%arg0: i32, %arg1: i32, %arg2: memref<1x8x32xf32, #tpu.memory_space<vmem>>, %arg3: memref<1x32xf32, #tpu.memory_space<vmem>>, %arg4: memref<1x32xf32, #tpu.memory_space<vmem>>, %arg5: memref<32x96xf32, #tpu.memory_space<vmem>>, %arg6: memref<1x96xf32, #tpu.memory_space<vmem>>, %arg7: memref<1x8x96xf32, #tpu.memory_space<vmem>>) attributes {dimension_semantics = [#tpu.dimension_semantics<parallel>, #tpu.dimension_semantics<parallel>], iteration_bounds = array<i64: 2, 2>, scalar_prefetch = 0 : i64, scratch_operands = 0 : i64, tpu.core_type = #tpu.core_type<tc>, window_params = [{transform_indices = @transform_0, window_bounds = array<i64: 1, 8, 32>}, {pipeline_mode = #tpu.pipeline_mode<synchronous>, transform_indices = @transform_1, window_bounds = array<i64: 1, 32>}, {pipeline_mode = #tpu.pipeline_mode<synchronous>, transform_indices = @transform_2, window_bounds = array<i64: 1, 32>}, {pipeline_mode = #tpu.pipeline_mode<synchronous>, transform_indices = @transform_3, window_bounds = array<i64: 32, 96>}, {pipeline_mode = #tpu.pipeline_mode<synchronous>, transform_indices = @transform_4, window_bounds = array<i64: 1, 96>}, {transform_indices = @transform_5, window_bounds = array<i64: 1, 8, 96>}]} {
    %c0 = arith.constant 0 : index
    %c0_0 = arith.constant 0 : index
    %c0_1 = arith.constant 0 : index
    %0 = vector.load %arg2[%c0, %c0_0, %c0_1] : memref<1x8x32xf32, #tpu.memory_space<vmem>>, vector<1x8x32xf32>
    %1 = vector.shape_cast %0 : vector<1x8x32xf32> to vector<8x32xf32>
    %c0_2 = arith.constant 0 : index
    %c0_3 = arith.constant 0 : index
    %2 = vector.load %arg3[%c0_2, %c0_3] : memref<1x32xf32, #tpu.memory_space<vmem>>, vector<1x32xf32>
    %c0_4 = arith.constant 0 : index
    %c0_5 = arith.constant 0 : index
    %3 = vector.load %arg4[%c0_4, %c0_5] : memref<1x32xf32, #tpu.memory_space<vmem>>, vector<1x32xf32>
    %cst = arith.constant dense<0.000000e+00> : vector<8xf32>
    %4 = vector.multi_reduction <add>, %1, %cst [1] : vector<8x32xf32> to vector<8xf32>
    %5 = vector.shape_cast %4 : vector<8xf32> to vector<8x1xf32>
    %cst_6 = arith.constant 3.200000e+01 : f32
    %6 = vector.broadcast %cst_6 : f32 to vector<8x1xf32>
    %7 = arith.divf %5, %6 : vector<8x1xf32>
    %8 = vector.broadcast %7 : vector<8x1xf32> to vector<8x32xf32>
    %9 = arith.subf %1, %8 : vector<8x32xf32>
    %10 = arith.mulf %9, %9 : vector<8x32xf32>
    %cst_7 = arith.constant dense<0.000000e+00> : vector<8xf32>
    %11 = vector.multi_reduction <add>, %10, %cst_7 [1] : vector<8x32xf32> to vector<8xf32>
    %12 = vector.shape_cast %11 : vector<8xf32> to vector<8x1xf32>
    %cst_8 = arith.constant 3.200000e+01 : f32
    %13 = vector.broadcast %cst_8 : f32 to vector<8x1xf32>
    %14 = arith.divf %12, %13 : vector<8x1xf32>
    %15 = vector.broadcast %7 : vector<8x1xf32> to vector<8x32xf32>
    %16 = arith.subf %1, %15 : vector<8x32xf32>
    %cst_9 = arith.constant 9.99999974E-6 : f32
    %17 = vector.broadcast %cst_9 : f32 to vector<8x1xf32>
    %18 = arith.addf %14, %17 : vector<8x1xf32>
    %19 = math.rsqrt %18 : vector<8x1xf32>
    %20 = vector.broadcast %19 : vector<8x1xf32> to vector<8x32xf32>
    %21 = arith.mulf %16, %20 : vector<8x32xf32>
    %22 = vector.broadcast %2 : vector<1x32xf32> to vector<8x32xf32>
    %23 = arith.mulf %21, %22 : vector<8x32xf32>
    %24 = vector.broadcast %3 : vector<1x32xf32> to vector<8x32xf32>
    %25 = arith.addf %23, %24 : vector<8x32xf32>
    %c0_10 = arith.constant 0 : index
    %c0_11 = arith.constant 0 : index
    %26 = vector.load %arg5[%c0_10, %c0_11] : memref<32x96xf32, #tpu.memory_space<vmem>>, vector<32x96xf32>
    %cst_12 = arith.constant dense<0.000000e+00> : vector<8x96xf32>
    %27 = tpu.matmul %25, %26, %cst_12 {dimension_numbers = #tpu.dot_dimension_numbers<[1], [0], [0], [1], [0, 0, 1, 1], [], []>} : vector<8x32xf32>, vector<32x96xf32>, vector<8x96xf32> -> vector<8x96xf32>
    %c0_13 = arith.constant 0 : index
    %c0_14 = arith.constant 0 : index
    %28 = vector.load %arg6[%c0_13, %c0_14] : memref<1x96xf32, #tpu.memory_space<vmem>>, vector<1x96xf32>
    %29 = vector.broadcast %28 : vector<1x96xf32> to vector<8x96xf32>
    %30 = arith.addf %27, %29 : vector<8x96xf32>
    %c0_15 = arith.constant 0 : index
    %c0_16 = arith.constant 0 : index
    %c0_17 = arith.constant 0 : index
    %31 = vector.load %arg7[%c0_15, %c0_16, %c0_17] : memref<1x8x96xf32, #tpu.memory_space<vmem>>, vector<1x8x96xf32>
    %32 = vector.shape_cast %31 : vector<1x8x96xf32> to vector<8x96xf32>
    %33 = vector.shape_cast %30 : vector<8x96xf32> to vector<1x8x96xf32>
    tpu.vector_store %arg7[%c0_15, %c0_16, %c0_17], %33 {strides = array<i32>} : memref<1x8x96xf32, #tpu.memory_space<vmem>>, vector<1x8x96xf32>,
    return
  }
  func.func @transform_0(%arg0: i32, %arg1: i32) -> (i32, i32, i32) {
    %c0_i32 = arith.constant 0 : i32
    %c0_i32_0 = arith.constant 0 : i32
    return %arg0, %arg1, %c0_i32 : i32, i32, i32
  }
  func.func @transform_1(%arg0: i32, %arg1: i32) -> (i32, i32) {
    %c0_i32 = arith.constant 0 : i32
    %c0_i32_0 = arith.constant 0 : i32
    %c0_i32_1 = arith.constant 0 : i32
    return %c0_i32, %c0_i32_0 : i32, i32
  }
  func.func @transform_2(%arg0: i32, %arg1: i32) -> (i32, i32) {
    %c0_i32 = arith.constant 0 : i32
    %c0_i32_0 = arith.constant 0 : i32
    %c0_i32_1 = arith.constant 0 : i32
    return %c0_i32, %c0_i32_0 : i32, i32
  }
  func.func @transform_3(%arg0: i32, %arg1: i32) -> (i32, i32) {
    %c0_i32 = arith.constant 0 : i32
    %c0_i32_0 = arith.constant 0 : i32
    %c0_i32_1 = arith.constant 0 : i32
    return %c0_i32, %c0_i32_0 : i32, i32
  }
  func.func @transform_4(%arg0: i32, %arg1: i32) -> (i32, i32) {
    %c0_i32 = arith.constant 0 : i32
    %c0_i32_0 = arith.constant 0 : i32
    %c0_i32_1 = arith.constant 0 : i32
    return %c0_i32, %c0_i32_0 : i32, i32
  }
  func.func @transform_5(%arg0: i32, %arg1: i32) -> (i32, i32, i32) {
    %c0_i32 = arith.constant 0 : i32
    %c0_i32_0 = arith.constant 0 : i32
    return %arg0, %arg1, %c0_i32 : i32, i32, i32
  }
}

</mosaic_0001>

<llo_original>
// kernel: tpu_custom_call.1
$region0: #{tpu_custom_call.1}
  #allocation0 [shape = 'u32[]', space=smem, size = 0x4, offset = 0x4, fixed_abs, tag = 'smem constant byte address 0x4 - core index']
  #allocation1 [shape = 'u32[72,128]{1,0:T(1,128)}', space=vmem, size = 0x9000, scoped, tag = 'internal scratch']
  %s0 = inlined_call_operand.hbm [shape: f32[2,16,32], index: 0, kind: input, shape index: {}]
  %s1 = inlined_call_operand.hbm [shape: f32[1,32], index: 1, kind: input, shape index: {}]
  %s2 = inlined_call_operand.vmem [shape: f32[1,32], index: 2, kind: input, shape index: {}]
  %s3 = inlined_call_operand.hbm [shape: f32[32,96], index: 3, kind: input, shape index: {}]
  %s4 = inlined_call_operand.vmem [shape: f32[1,96], index: 4, kind: input, shape index: {}]
  %s5 = inlined_call_operand.hbm [shape: f32[2,16,96], index: 5, kind: output, shape index: {}]
  %s6 = sld [smem:[#allocation0]]
  $region65: #{tpu_custom_call.1} parent=0
    _
  %s8 = ssub.s32 1, %s6
  %s9 = scalar_select 0, %s8, %s6
  $region1: #{tpu_custom_call.1} parent=0
    #allocation2 [shape = 'u8[8192]{0}', space=vmem, size = 0x2000, scoped, tag = 'input window, operand 0']
    #allocation3 [shape = 's32[2]{0}', space=sflag, size = 0x8, scoped, tag = 'scoped memory for tpu_custom_call.1']
    #allocation4 [shape = 's32[2]{0}', space=sflag, size = 0x8, scoped, tag = 'scoped memory for tpu_custom_call.1']
    #allocation5 [shape = 'u8[512]{0}', space=vmem, size = 0x400, scoped, tag = 'input window, operand 1, single buffered']
    #allocation6 [shape = 's32[1]{0}', space=sflag, size = 0x4, scoped, tag = 'scoped memory for tpu_custom_call.1']
    #allocation7 [shape = 'u8[16384]{0}', space=vmem, size = 0x4000, scoped, tag = 'input window, operand 3, single buffered']
    #allocation8 [shape = 'u8[8192]{0}', space=vmem, size = 0x2000, scoped, tag = 'output window, operand 0']
    %10 = vsyncpa [#allocation3], 0
    %s11 = scalar_lea.sflag [#allocation3], 1
    %12 = vsyncpa %s11, 0
    %13 = vsyncpa [#allocation6], 0
    %14 = vsyncpa [#allocation4], 0
    %s15 = scalar_lea.sflag [#allocation4], 1
    %16 = vsyncpa %s15, 0
    loop: start=0, step=1, limit=6
    $region2: #{tpu_custom_call.1} parent=1 // loop_pre_header
      _
    $region3: #{tpu_custom_call.1} parent=1 // loop_header
      %s18 = sphi 0, %s22
      %p19 = scmp.ge.s32.totalorder %s18, 6
      %s25 = sphi 0, %s37
      %s26 = sphi 0, %s33
      %s27 = sphi 0, %s25
      %s28 = sphi 0, %s26
      %s29 = sphi 0, %s27
      %s30 = sphi 0, %s28
      %s42 = sphi 0, %s44
      %s45 = sphi 0, %s42
      %s46 = sphi 0, %s45
      %s62 = sphi 0, %s46
      %s66 = sphi 0, %s66
      %s68 = sphi 0, %s66
      %s69 = sphi 0, %s68
      %s83 = sphi 0, %s69
      %s87 = sphi 0, %s87
      %s89 = sphi 0, %s87
      %s90 = sphi 0, %s89
      %s104 = sphi 0, %s90
      %s108 = sphi 0, %s108
      %s110 = sphi 0, %s108
      %s111 = sphi 0, %s110
      %s125 = sphi 0, %s111
      %s129 = sphi 0, %s129
      %s131 = sphi 0, %s129
      %s132 = sphi 0, %s131
      %s146 = sphi 0, %s132
      %s154 = sphi 0, %s156
      %s157 = sphi 0, %s154
      %s158 = sphi 0, %s157
      %s174 = sphi 0, %s158
    $region4: #{tpu_custom_call.1} parent=1 // loop_header_branch
      %21 = sbr.rel (%p19) target = $region8
    $region5: #{tpu_custom_call.1} parent=1 // loop_body
      %s23 = ssub.s32 %s18, 1
      %s24 = ssub.s32 %s18, 2
      %s31 = sadd.s32 1, %s26
      %p32 = scmp.ge.s32.totalorder %s31, 2
      %s33 = scalar_select %p32, 0, %s31
      %s34 = sadd.s32 1, %s25
      %s35 = scalar_select %p32, %s34, %s25
      %p36 = scmp.ge.s32.totalorder %s35, 2
      %s37 = scalar_select %p36, 0, %s35
      %s38 = ssub.s32 %s25, %s37
      %s39 = ssub.s32 %s26, %s33
      %s40 = sor.u32 %s38, %s39
      %p41 = scmp.eq.s32.totalorder %s40, 0
      %s43 = sadd.s32 %s42, 1
      %s44 = scalar_select %p41, %s42, %s43
      %p47 = pneg %p41
      %p48 = scmp.eq.s32.totalorder %s18, 3
      %p49 = por %p47, %p48
      %p50 = scmp.ne.s32.totalorder %s42, %s45
      %p51 = scmp.eq.s32.totalorder %s18, 0
      %p52 = por %p50, %p51
      %p53 = scmp.ne.s32.totalorder %s42, %s45
      %p54 = scmp.eq.s32.totalorder %s23, 3
      %p55 = por %p53, %p54
      %p56 = scmp.ne.s32.totalorder %s45, %s46
      %p57 = scmp.eq.s32.totalorder %s23, 0
      %p58 = por %p56, %p57
      %p59 = scmp.ne.s32.totalorder %s45, %s46
      %p60 = scmp.eq.s32.totalorder %s24, 3
      %p61 = por %p59, %p60
      %p63 = scmp.ne.s32.totalorder %s46, %s62
      %p64 = scmp.eq.s32.totalorder %s24, 0
      %p65 = por %p63, %p64
      %s67 = sadd.s32 %s66, 1
      %p70 = scmp.eq.s32.totalorder %s18, 3
      %p71 = scmp.ne.s32.totalorder %s66, %s68
      %p72 = scmp.eq.s32.totalorder %s18, 0
      %p73 = por %p71, %p72
      %p74 = scmp.ne.s32.totalorder %s66, %s68
      %p75 = scmp.eq.s32.totalorder %s23, 3
      %p76 = por %p74, %p75
      %p77 = scmp.ne.s32.totalorder %s68, %s69
      %p78 = scmp.eq.s32.totalorder %s23, 0
      %p79 = por %p77, %p78
      %p80 = scmp.ne.s32.totalorder %s68, %s69
      %p81 = scmp.eq.s32.totalorder %s24, 3
      %p82 = por %p80, %p81
      %p84 = scmp.ne.s32.totalorder %s69, %s83
      %p85 = scmp.eq.s32.totalorder %s24, 0
      %p86 = por %p84, %p85
      %s88 = sadd.s32 %s87, 1
      %p91 = scmp.eq.s32.totalorder %s18, 3
      %p92 = scmp.ne.s32.totalorder %s87, %s89
      %p93 = scmp.eq.s32.totalorder %s18, 0
      %p94 = por %p92, %p93
      %p95 = scmp.ne.s32.totalorder %s87, %s89
      %p96 = scmp.eq.s32.totalorder %s23, 3
      %p97 = por %p95, %p96
      %p98 = scmp.ne.s32.totalorder %s89, %s90
      %p99 = scmp.eq.s32.totalorder %s23, 0
      %p100 = por %p98, %p99
      %p101 = scmp.ne.s32.totalorder %s89, %s90
      %p102 = scmp.eq.s32.totalorder %s24, 3
      %p103 = por %p101, %p102
      %p105 = scmp.ne.s32.totalorder %s90, %s104
      %p106 = scmp.eq.s32.totalorder %s24, 0
      %p107 = por %p105, %p106
      %s109 = sadd.s32 %s108, 1
      %p112 = scmp.eq.s32.totalorder %s18, 3
      %p113 = scmp.ne.s32.totalorder %s108, %s110
      %p114 = scmp.eq.s32.totalorder %s18, 0
      %p115 = por %p113, %p114
      %p116 = scmp.ne.s32.totalorder %s108, %s110
      %p117 = scmp.eq.s32.totalorder %s23, 3
      %p118 = por %p116, %p117
      %p119 = scmp.ne.s32.totalorder %s110, %s111
      %p120 = scmp.eq.s32.totalorder %s23, 0
      %p121 = por %p119, %p120
      %p122 = scmp.ne.s32.totalorder %s110, %s111
      %p123 = scmp.eq.s32.totalorder %s24, 3
      %p124 = por %p122, %p123
      %p126 = scmp.ne.s32.totalorder %s111, %s125
      %p127 = scmp.eq.s32.totalorder %s24, 0
      %p128 = por %p126, %p127
      %s130 = sadd.s32 %s129, 1
      %p133 = scmp.eq.s32.totalorder %s18, 3
      %p134 = scmp.ne.s32.totalorder %s129, %s131
      %p135 = scmp.eq.s32.totalorder %s18, 0
      %p136 = por %p134, %p135
      %p137 = scmp.ne.s32.totalorder %s129, %s131
      %p138 = scmp.eq.s32.totalorder %s23, 3
      %p139 = por %p137, %p138
      %p140 = scmp.ne.s32.totalorder %s131, %s132
      %p141 = scmp.eq.s32.totalorder %s23, 0
      %p142 = por %p140, %p141
      %p143 = scmp.ne.s32.totalorder %s131, %s132
      %p144 = scmp.eq.s32.totalorder %s24, 3
      %p145 = por %p143, %p144
      %p147 = scmp.ne.s32.totalorder %s132, %s146
      %p148 = scmp.eq.s32.totalorder %s24, 0
      %p149 = por %p147, %p148
      %s150 = ssub.s32 %s25, %s37
      %s151 = ssub.s32 %s26, %s33
      %s152 = sor.u32 %s150, %s151
      %p153 = scmp.eq.s32.totalorder %s152, 0
      %s155 = sadd.s32 %s154, 1
      %s156 = scalar_select %p153, %s154, %s155
      %p159 = pneg %p153
      %p160 = scmp.eq.s32.totalorder %s18, 3
      %p161 = por %p159, %p160
      %p162 = scmp.ne.s32.totalorder %s154, %s157
      %p163 = scmp.eq.s32.totalorder %s18, 0
      %p164 = por %p162, %p163
      %p165 = scmp.ne.s32.totalorder %s154, %s157
      %p166 = scmp.eq.s32.totalorder %s23, 3
      %p167 = por %p165, %p166
      %p168 = scmp.ne.s32.totalorder %s157, %s158
      %p169 = scmp.eq.s32.totalorder %s23, 0
      %p170 = por %p168, %p169
      %p171 = scmp.ne.s32.totalorder %s157, %s158
      %p172 = scmp.eq.s32.totalorder %s24, 3
      %p173 = por %p171, %p172
      %p175 = scmp.ne.s32.totalorder %s158, %s174
      %p176 = scmp.eq.s32.totalorder %s24, 0
      %p177 = por %p175, %p176
      %p178 = scmp.le.s32.totalorder 1, %s18
      %p179 = scmp.lt.s32.totalorder %s18, 5
      %p180 = pnand %p178, %p179
      %p181 = pneg %p180
      // Predicated region
      $region9: #{tpu_custom_call.1} parent=5 // pred_check
        _
      $region10: #{tpu_custom_call.1} parent=5 // pred_check_branch
        %183 = sbr.rel (%p180) target = $region12
      $region11: #{tpu_custom_call.1} parent=5 // pred_region
        %s184 = ssub.s32 %s18, 1
        // Predicated region
        $region13: #{tpu_custom_call.1} parent=11 // pred_check
          %p185 = pneg %p79
        $region14: #{tpu_custom_call.1} parent=11 // pred_check_branch
          %187 = sbr.rel (%p185) target = $region16
        $region15: #{tpu_custom_call.1} parent=11 // pred_region
          %189 = vsyncadd [#allocation6], 0
          %s191 = sshll.u32 %s1, 4
          %s192 = int_to_ptr.hbm [resolvable:$true] %s191
          %s193 = sshll.u32 [#allocation5], 4
          %s194 = int_to_ptr.vmem [resolvable:$true] %s193
          %196 = dma.hbm_to_vmem [thread:$0]  %s192, 16, %s194, [#allocation6]
        $region16: #{tpu_custom_call.1} parent=11 // pred_fallthru
          _
        // Predicated region
        $region17: #{tpu_custom_call.1} parent=11 // pred_check
          %p197 = pneg %p100
        $region18: #{tpu_custom_call.1} parent=11 // pred_check_branch
          %199 = sbr.rel (%p197) target = $region20
        $region19: #{tpu_custom_call.1} parent=11 // pred_region
          _
        $region20: #{tpu_custom_call.1} parent=11 // pred_fallthru
          _
        // Predicated region
        $region21: #{tpu_custom_call.1} parent=11 // pred_check
          %p200 = pneg %p121
        $region22: #{tpu_custom_call.1} parent=11 // pred_check_branch
          %202 = sbr.rel (%p200) target = $region24
        $region23: #{tpu_custom_call.1} parent=11 // pred_region
          %204 = vsyncadd [#allocation6], 0
          %s205 = sshll.u32 %s3, 4
          %s206 = int_to_ptr.hbm [resolvable:$true] %s205
          %s207 = sshll.u32 [#allocation7], 4
          %s208 = int_to_ptr.vmem [resolvable:$true] %s207
          %213 = dma.hbm_to_vmem [thread:$0]  %s206, 512, %s208, [#allocation6], 128, 128, 8
        $region24: #{tpu_custom_call.1} parent=11 // pred_fallthru
          _
        // Predicated region
        $region25: #{tpu_custom_call.1} parent=11 // pred_check
          %p214 = pneg %p142
        $region26: #{tpu_custom_call.1} parent=11 // pred_check_branch
          %216 = sbr.rel (%p214) target = $region28
        $region27: #{tpu_custom_call.1} parent=11 // pred_region
          _
        $region28: #{tpu_custom_call.1} parent=11 // pred_fallthru
          _
      $region12: #{tpu_custom_call.1} parent=5 // pred_fallthru
        _
      %p217 = scmp.lt.s32.totalorder %s18, 4
      // Predicated region
      $region29: #{tpu_custom_call.1} parent=5 // pred_check
        %p218 = pneg %p217
      $region30: #{tpu_custom_call.1} parent=5 // pred_check_branch
        %220 = sbr.rel (%p218) target = $region32
      $region31: #{tpu_custom_call.1} parent=5 // pred_region
        // Predicated region
        $region33: #{tpu_custom_call.1} parent=31 // pred_check
          %p221 = pneg %p52
        $region34: #{tpu_custom_call.1} parent=31 // pred_check_branch
          %223 = sbr.rel (%p221) target = $region36
        $region35: #{tpu_custom_call.1} parent=31 // pred_region
          %s224 = sand.u32 %s42, 1
          %s225 = scalar_lea.sflag [#allocation3], %s224
          %s226 = sand.u32 %s42, 1
          %s227 = smul.addr %s226, 8
          %s228 = scalar_lea.vmem [#allocation2], %s227
          %230 = vsyncadd %s225, 0
          %s231 = smul.addr %s25, 2
          %s232 = sadd.s32 %s26, %s231
          %s233 = smul.addr %s232, 8
          %s234 = scalar_lea.hbm %s0, %s233
          %s236 = sshll.u32 %s234, 4
          %s237 = int_to_ptr.hbm [resolvable:$true] %s236
          %s238 = sshll.u32 %s228, 4
          %s239 = int_to_ptr.vmem [resolvable:$true] %s238
          %241 = dma.hbm_to_vmem [thread:$0]  %s237, 128, %s239, %s225
        $region36: #{tpu_custom_call.1} parent=31 // pred_fallthru
          _
      $region32: #{tpu_custom_call.1} parent=5 // pred_fallthru
        _
      %p242 = scmp.le.s32.totalorder 1, %s18
      %p243 = scmp.lt.s32.totalorder %s18, 5
      %p244 = pnand %p242, %p243
      %p245 = pneg %p244
      // Predicated region
      $region37: #{tpu_custom_call.1} parent=5 // pred_check
        _
      $region38: #{tpu_custom_call.1} parent=5 // pred_check_branch
        %247 = sbr.rel (%p244) target = $region40
      $region39: #{tpu_custom_call.1} parent=5 // pred_region
        %s248 = ssub.s32 %s18, 1
        %s249 = sand.u32 %s45, 1
        %s250 = scalar_lea.sflag [#allocation3], %s249
        %s251 = sand.u32 %s45, 1
        %s252 = smul.addr %s251, 8
        %s253 = scalar_lea.vmem [#allocation2], %s252
        // Predicated region
        $region41: #{tpu_custom_call.1} parent=39 // pred_check
          %p254 = pneg %p58
        $region42: #{tpu_custom_call.1} parent=39 // pred_check_branch
          %256 = sbr.rel (%p254) target = $region44
        $region43: #{tpu_custom_call.1} parent=39 // pred_region
          %258 = dma.done %s250, 128
        $region44: #{tpu_custom_call.1} parent=39 // pred_fallthru
          _
        // Predicated region
        $region45: #{tpu_custom_call.1} parent=39 // pred_check
          %p259 = pneg %p79
        $region46: #{tpu_custom_call.1} parent=39 // pred_check_branch
          %261 = sbr.rel (%p259) target = $region48
        $region47: #{tpu_custom_call.1} parent=39 // pred_region
          %263 = dma.done [#allocation6], 16
        $region48: #{tpu_custom_call.1} parent=39 // pred_fallthru
          _
        // Predicated region
        $region49: #{tpu_custom_call.1} parent=39 // pred_check
          %p264 = pneg %p121
        $region50: #{tpu_custom_call.1} parent=39 // pred_check_branch
          %266 = sbr.rel (%p264) target = $region52
        $region51: #{tpu_custom_call.1} parent=39 // pred_region
          %268 = dma.done [#allocation6], 512
        $region52: #{tpu_custom_call.1} parent=39 // pred_fallthru
          _
        %s269 = sand.u32 %s45, 1
        %s270 = scalar_lea.sflag [#allocation3], %s269
        %s271 = sand.u32 %s45, 1
        %s272 = smul.addr %s271, 8
        %s273 = scalar_lea.vmem [#allocation2], %s272
        %p274 = pneg %p58
        %p275 = pneg %p55
        %p276 = pneg %p79
        %p277 = pneg %p76
        %p278 = pneg %p100
        %p279 = pneg %p97
        %p280 = pneg %p121
        %p281 = pneg %p118
        %p282 = pneg %p142
        %p283 = pneg %p139
        %p284 = pneg %p170
        %p285 = pneg %p167
        %s286 = sand.u32 %s157, 1
        %s287 = scalar_lea.sflag [#allocation4], %s286
        %s288 = sand.u32 %s157, 1
        %s289 = smul.addr %s288, 8
        %s290 = scalar_lea.vmem [#allocation8], %s289
        %v291 = vld [vmem:[%s253] sm:$0xff]
        %v292 = vld [vmem:[#allocation5] sm:$0x1]
        %v293 = vld [vmem:[%s2] sm:$0x1]
        %vm294 = vcmask 261120
        %v295 = vsel %vm294, %v291, 0.0
        %296 = vadd.xlane.f32.xlu0 %v295
        %v297 = vpop.xlane.xlu0 %296
        %v298 = vrcp.pop 32.0
        %v299 = vmul.f32 32.0, %v298
        %v300 = vsub.f32 1.0, %v299
        %v301 = vmul.f32 %v298, %v300
        %v302 = vadd.f32 %v298, %v301
        %vm303 = vweird.f32 %v298
        %v304 = vsel %vm303, %v298, %v302
        %v305 = vmul.f32 %v297, %v304
        %v306 = vsub.f32 %v291, %v305
        %v307 = vmul.f32 %v306, %v306
        %v308 = vsel %vm294, %v307, 0.0
        %309 = vadd.xlane.f32.xlu0 %v308
        %v310 = vpop.xlane.xlu0 %309
        %v311 = vmul.f32 %v310, %v304
        %v312 = vadd.f32 %v311, 1e-05
        %v313 = vrsqrt.pop %v312
        %v314 = vmul.f32 %v313, %v312
        %v315 = vmul.f32 %v314, %v313
        %v316 = vmul.f32 0.5, %v315
        %v317 = vsub.f32 1.5, %v316
        %v318 = vmul.f32 %v313, %v317
        %vm319 = vweird.f32 %v312
        %vm320 = vweird.f32 %v313
        %vm321 = vmor %vm319, %vm320
        %v322 = vsel %vm321, %v313, %v318
        %v323 = vmul.f32 %v306, %v322
        %v325 = vperm.slane %v292, 0
        %v327 = vmul.f32 %v323, %v325
        %v329 = vperm.slane %v293, 0
        %v331 = vadd.f32 %v327, %v329
        %v332 = vld [vmem:[#allocation7] sm:$0xff]
        %v333 = vld [vmem:[#allocation7 + $0x8] sm:$0xff]
        %v334 = vld [vmem:[#allocation7 + $0x10] sm:$0xff]
        %v335 = vld [vmem:[#allocation7 + $0x18] sm:$0xff]
        %v336 = vld [vmem:[%s4] sm:$0x1]
        %v338 = vperm.slane %v336, 0
        %v341 = vsel %vm294, %v331, 0
        %343 = vmatpush.msra.mxu0 0.0
        %344 = vmatpush.msra.mxu0 0.0
        %345 = vmatpush.msra.mxu0 0.0
        %346 = vmatpush.msra.mxu0 0.0
        %347 = vmatpush.msra.mxu0 0.0
        %348 = vmatpush.msra.mxu0 0.0
        %349 = vmatpush.msra.mxu0 0.0
        %350 = vmatpush.msra.mxu0 0.0
        %351 = vmatpush.msra.mxu0 0.0
        %352 = vmatpush.msra.mxu0 0.0
        %353 = vmatpush.msra.mxu0 0.0
        %354 = vmatpush.msra.mxu0 0.0
        %355 = vmatpush.msra.mxu0 %v335
        %356 = vmatpush.msra.mxu0 %v334
        %357 = vmatpush.msra.mxu0 %v333
        %358 = vmatpush.msra.mxu0 %v332
        %359 = vmatmul.f32.gmra.mxu0 %v341
        %v360 = vpop.f32.mrf.mxu0
        %v361 = vadd.f32 %v338, %v360
        %362 = vdwg.mxu0
        %vm363 = vcmask 785408
        %364 = vst.msk [vmem:[%s290] sm:$0xff] %vm363, %v361
        %s365 = sand.u32 %s157, 1
        %s366 = scalar_lea.sflag [#allocation4], %s365
        %s367 = sand.u32 %s157, 1
        %s368 = smul.addr %s367, 8
        %s369 = scalar_lea.vmem [#allocation8], %s368
        // Predicated region
        $region53: #{tpu_custom_call.1} parent=39 // pred_check
          %p370 = pneg %p167
        $region54: #{tpu_custom_call.1} parent=39 // pred_check_branch
          %372 = sbr.rel (%p370) target = $region56
        $region55: #{tpu_custom_call.1} parent=39 // pred_region
          %374 = vsyncadd %s366, 0
          %s375 = smul.addr %s27, 2
          %s376 = sadd.s32 %s28, %s375
          %s377 = smul.addr %s376, 8
          %s378 = scalar_lea.hbm %s5, %s377
          %s380 = sshll.u32 %s369, 4
          %s381 = int_to_ptr.vmem [resolvable:$true] %s380
          %s382 = sshll.u32 %s378, 4
          %s383 = int_to_ptr.hbm [resolvable:$true] %s382
          %385 = dma.vmem_to_hbm [thread:$0]  %s381, 128, %s383, %s366
        $region56: #{tpu_custom_call.1} parent=39 // pred_fallthru
          _
      $region40: #{tpu_custom_call.1} parent=5 // pred_fallthru
        _
      %p386 = scmp.le.s32.totalorder 2, %s18
      // Predicated region
      $region57: #{tpu_custom_call.1} parent=5 // pred_check
        %p387 = pneg %p386
      $region58: #{tpu_custom_call.1} parent=5 // pred_check_branch
        %389 = sbr.rel (%p387) target = $region60
      $region59: #{tpu_custom_call.1} parent=5 // pred_region
        %s390 = ssub.s32 %s18, 2
        // Predicated region
        $region61: #{tpu_custom_call.1} parent=59 // pred_check
          %p391 = pneg %p173
        $region62: #{tpu_custom_call.1} parent=59 // pred_check_branch
          %393 = sbr.rel (%p391) target = $region64
        $region63: #{tpu_custom_call.1} parent=59 // pred_region
          %s394 = sand.u32 %s158, 1
          %s395 = scalar_lea.sflag [#allocation4], %s394
          %s396 = sand.u32 %s158, 1
          %s397 = smul.addr %s396, 8
          %s398 = scalar_lea.vmem [#allocation8], %s397
          %400 = dma.done %s395, 128
        $region64: #{tpu_custom_call.1} parent=59 // pred_fallthru
          _
      $region60: #{tpu_custom_call.1} parent=5 // pred_fallthru
        _
    $region6: #{tpu_custom_call.1} parent=1 // loop_footer
      %s22 = sadd.s32 1, %s18
    $region7: #{tpu_custom_call.1} parent=1 // loop_footer_branch
      %17 = sbr.rel target = $region3
    $region8: #{tpu_custom_call.1} parent=1 // loop_exit
      _
    %401 = vsyncpa [#allocation3], 1
    %s402 = scalar_lea.sflag [#allocation3], 1
    %403 = vsyncpa %s402, 1
    %404 = vsyncpa [#allocation6], 1
    %405 = vsyncpa [#allocation4], 1
    %s406 = scalar_lea.sflag [#allocation4], 1
    %407 = vsyncpa %s406, 1

// kernel: tpu_custom_call.1
$region0: #{tpu_custom_call.1}
  #allocation0 [shape = 'u32[]', space=smem, size = 0x4, offset = 0x4, fixed_abs, tag = 'smem constant byte address 0x4 - core index']
  #allocation1 [shape = 'u32[72,128]{1,0:T(1,128)}', space=vmem, size = 0x9000, scoped, tag = 'internal scratch']
  %s0 = inlined_call_operand.hbm [shape: f32[2,16,32], index: 0, kind: input, shape index: {}]
  %s1 = inlined_call_operand.hbm [shape: f32[1,32], index: 1, kind: input, shape index: {}]
  %s2 = inlined_call_operand.vmem [shape: f32[1,32], index: 2, kind: input, shape index: {}]
  %s3 = inlined_call_operand.hbm [shape: f32[32,96], index: 3, kind: input, shape index: {}]
  %s4 = inlined_call_operand.vmem [shape: f32[1,96], index: 4, kind: input, shape index: {}]
  %s5 = inlined_call_operand.hbm [shape: f32[2,16,96], index: 5, kind: output, shape index: {}]
  %s6 = sld [smem:[#allocation0]]
  $region65: #{tpu_custom_call.1} parent=0
    _
  %s8 = ssub.s32 1, %s6
  %s9 = scalar_select 0, %s8, %s6
  $region1: #{tpu_custom_call.1} parent=0
    #allocation2 [shape = 'u8[8192]{0}', space=vmem, size = 0x2000, scoped, tag = 'input window, operand 0']
    #allocation3 [shape = 's32[2]{0}', space=sflag, size = 0x8, scoped, tag = 'scoped memory for tpu_custom_call.1']
    #allocation4 [shape = 's32[2]{0}', space=sflag, size = 0x8, scoped, tag = 'scoped memory for tpu_custom_call.1']
    #allocation5 [shape = 'u8[512]{0}', space=vmem, size = 0x400, scoped, tag = 'input window, operand 1, single buffered']
    #allocation6 [shape = 's32[1]{0}', space=sflag, size = 0x4, scoped, tag = 'scoped memory for tpu_custom_call.1']
    #allocation7 [shape = 'u8[16384]{0}', space=vmem, size = 0x4000, scoped, tag = 'input window, operand 3, single buffered']
    #allocation8 [shape = 'u8[8192]{0}', space=vmem, size = 0x2000, scoped, tag = 'output window, operand 0']
    %10 = vsyncpa [#allocation3], 0
    %s11 = scalar_lea.sflag [#allocation3], 1
    %12 = vsyncpa %s11, 0
    %13 = vsyncpa [#allocation6], 0
    %14 = vsyncpa [#allocation4], 0
    %s15 = scalar_lea.sflag [#allocation4], 1
    %16 = vsyncpa %s15, 0
    loop: start=0, step=1, limit=6
    $region2: #{tpu_custom_call.1} parent=1 // loop_pre_header
      _
    $region3: #{tpu_custom_call.1} parent=1 // loop_header
      %s18 = sphi 0, %s22
      %p19 = scmp.ge.s32.totalorder %s18, 6
      %s25 = sphi 0, %s37
      %s26 = sphi 0, %s33
      %s27 = sphi 0, %s25
      %s28 = sphi 0, %s26
      %s29 = sphi 0, %s27
      %s30 = sphi 0, %s28
      %s42 = sphi 0, %s44
      %s45 = sphi 0, %s42
      %s46 = sphi 0, %s45
      %s62 = sphi 0, %s46
      %s66 = sphi 0, %s66
      %s68 = sphi 0, %s66
      %s69 = sphi 0, %s68
      %s83 = sphi 0, %s69
      %s87 = sphi 0, %s87
      %s89 = sphi 0, %s87
      %s90 = sphi 0, %s89
      %s104 = sphi 0, %s90
      %s108 = sphi 0, %s108
      %s110 = sphi 0, %s108
      %s111 = sphi 0, %s110
      %s125 = sphi 0, %s111
      %s129 = sphi 0, %s129
      %s131 = sphi 0, %s129
      %s132 = sphi 0, %s131
      %s146 = sphi 0, %s132
      %s154 = sphi 0, %s156
      %s157 = sphi 0, %s154
      %s158 = sphi 0, %s157
      %s174 = sphi 0, %s158
    $region4: #{tpu_custom_call.1} parent=1 // loop_header_branch
      %21 = sbr.rel (%p19) target = $region8
    $region5: #{tpu_custom_call.1} parent=1 // loop_body
      %s23 = ssub.s32 %s18, 1
      %s24 = ssub.s32 %s18, 2
      %s31 = sadd.s32 1, %s26
      %p32 = scmp.ge.s32.totalorder %s31, 2
      %s33 = scalar_select %p32, 0, %s31
      %s34 = sadd.s32 1, %s25
      %s35 = scalar_select %p32, %s34, %s25
      %p36 = scmp.ge.s32.totalorder %s35, 2
      %s37 = scalar_select %p36, 0, %s35
      %s38 = ssub.s32 %s25, %s37
      %s39 = ssub.s32 %s26, %s33
      %s40 = sor.u32 %s38, %s39
      %p41 = scmp.eq.s32.totalorder %s40, 0
      %s43 = sadd.s32 %s42, 1
      %s44 = scalar_select %p41, %s42, %s43
      %p47 = pneg %p41
      %p48 = scmp.eq.s32.totalorder %s18, 3
      %p49 = por %p47, %p48
      %p50 = scmp.ne.s32.totalorder %s42, %s45
      %p51 = scmp.eq.s32.totalorder %s18, 0
      %p52 = por %p50, %p51
      %p53 = scmp.ne.s32.totalorder %s42, %s45
      %p54 = scmp.eq.s32.totalorder %s23, 3
      %p55 = por %p53, %p54
      %p56 = scmp.ne.s32.totalorder %s45, %s46
      %p57 = scmp.eq.s32.totalorder %s23, 0
      %p58 = por %p56, %p57
      %p59 = scmp.ne.s32.totalorder %s45, %s46
      %p60 = scmp.eq.s32.totalorder %s24, 3
      %p61 = por %p59, %p60
      %p63 = scmp.ne.s32.totalorder %s46, %s62
      %p64 = scmp.eq.s32.totalorder %s24, 0
      %p65 = por %p63, %p64
      %s67 = sadd.s32 %s66, 1
      %p70 = scmp.eq.s32.totalorder %s18, 3
      %p71 = scmp.ne.s32.totalorder %s66, %s68
      %p72 = scmp.eq.s32.totalorder %s18, 0
      %p73 = por %p71, %p72
      %p74 = scmp.ne.s32.totalorder %s66, %s68
      %p75 = scmp.eq.s32.totalorder %s23, 3
      %p76 = por %p74, %p75
      %p77 = scmp.ne.s32.totalorder %s68, %s69
      %p78 = scmp.eq.s32.totalorder %s23, 0
      %p79 = por %p77, %p78
      %p80 = scmp.ne.s32.totalorder %s68, %s69
      %p81 = scmp.eq.s32.totalorder %s24, 3
      %p82 = por %p80, %p81
      %p84 = scmp.ne.s32.totalorder %s69, %s83
      %p85 = scmp.eq.s32.totalorder %s24, 0
      %p86 = por %p84, %p85
      %s88 = sadd.s32 %s87, 1
      %p91 = scmp.eq.s32.totalorder %s18, 3
      %p92 = scmp.ne.s32.totalorder %s87, %s89
      %p93 = scmp.eq.s32.totalorder %s18, 0
      %p94 = por %p92, %p93
      %p95 = scmp.ne.s32.totalorder %s87, %s89
      %p96 = scmp.eq.s32.totalorder %s23, 3
      %p97 = por %p95, %p96
      %p98 = scmp.ne.s32.totalorder %s89, %s90
      %p99 = scmp.eq.s32.totalorder %s23, 0
      %p100 = por %p98, %p99
      %p101 = scmp.ne.s32.totalorder %s89, %s90
      %p102 = scmp.eq.s32.totalorder %s24, 3
      %p103 = por %p101, %p102
      %p105 = scmp.ne.s32.totalorder %s90, %s104
      %p106 = scmp.eq.s32.totalorder %s24, 0
      %p107 = por %p105, %p106
      %s109 = sadd.s32 %s108, 1
      %p112 = scmp.eq.s32.totalorder %s18, 3
      %p113 = scmp.ne.s32.totalorder %s108, %s110
      %p114 = scmp.eq.s32.totalorder %s18, 0
      %p115 = por %p113, %p114
      %p116 = scmp.ne.s32.totalorder %s108, %s110
      %p117 = scmp.eq.s32.totalorder %s23, 3
      %p118 = por %p116, %p117
      %p119 = scmp.ne.s32.totalorder %s110, %s111
      %p120 = scmp.eq.s32.totalorder %s23, 0
      %p121 = por %p119, %p120
      %p122 = scmp.ne.s32.totalorder %s110, %s111
      %p123 = scmp.eq.s32.totalorder %s24, 3
      %p124 = por %p122, %p123
      %p126 = scmp.ne.s32.totalorder %s111, %s125
      %p127 = scmp.eq.s32.totalorder %s24, 0
      %p128 = por %p126, %p127
      %s130 = sadd.s32 %s129, 1
      %p133 = scmp.eq.s32.totalorder %s18, 3
      %p134 = scmp.ne.s32.totalorder %s129, %s131
      %p135 = scmp.eq.s32.totalorder %s18, 0
      %p136 = por %p134, %p135
      %p137 = scmp.ne.s32.totalorder %s129, %s131
      %p138 = scmp.eq.s32.totalorder %s23, 3
      %p139 = por %p137, %p138
      %p140 = scmp.ne.s32.totalorder %s131, %s132
      %p141 = scmp.eq.s32.totalorder %s23, 0
      %p142 = por %p140, %p141
      %p143 = scmp.ne.s32.totalorder %s131, %s132
      %p144 = scmp.eq.s32.totalorder %s24, 3
      %p145 = por %p143, %p144
      %p147 = scmp.ne.s32.totalorder %s132, %s146
      %p148 = scmp.eq.s32.totalorder %s24, 0
      %p149 = por %p147, %p148
      %s150 = ssub.s32 %s25, %s37
      %s151 = ssub.s32 %s26, %s33
      %s152 = sor.u32 %s150, %s151
      %p153 = scmp.eq.s32.totalorder %s152, 0
      %s155 = sadd.s32 %s154, 1
      %s156 = scalar_select %p153, %s154, %s155
      %p159 = pneg %p153
      %p160 = scmp.eq.s32.totalorder %s18, 3
      %p161 = por %p159, %p160
      %p162 = scmp.ne.s32.totalorder %s154, %s157
      %p163 = scmp.eq.s32.totalorder %s18, 0
      %p164 = por %p162, %p163
      %p165 = scmp.ne.s32.totalorder %s154, %s157
      %p166 = scmp.eq.s32.totalorder %s23, 3
      %p167 = por %p165, %p166
      %p168 = scmp.ne.s32.totalorder %s157, %s158
      %p169 = scmp.eq.s32.totalorder %s23, 0
      %p170 = por %p168, %p169
      %p171 = scmp.ne.s32.totalorder %s157, %s158
      %p172 = scmp.eq.s32.totalorder %s24, 3
      %p173 = por %p171, %p172
      %p175 = scmp.ne.s32.totalorder %s158, %s174
      %p176 = scmp.eq.s32.totalorder %s24, 0
      %p177 = por %p175, %p176
      %p178 = scmp.le.s32.totalorder 1, %s18
      %p179 = scmp.lt.s32.totalorder %s18, 5
      %p180 = pnand %p178, %p179
      %p181 = pneg %p180
      // Predicated region
      $region9: #{tpu_custom_call.1} parent=5 // pred_check
        _
      $region10: #{tpu_custom_call.1} parent=5 // pred_check_branch
        %183 = sbr.rel (%p180) target = $region12
      $region11: #{tpu_custom_call.1} parent=5 // pred_region
        %s184 = ssub.s32 %s18, 1
        // Predicated region
        $region13: #{tpu_custom_call.1} parent=11 // pred_check
          %p185 = pneg %p79
        $region14: #{tpu_custom_call.1} parent=11 // pred_check_branch
          %187 = sbr.rel (%p185) target = $region16
        $region15: #{tpu_custom_call.1} parent=11 // pred_region
          %189 = vsyncadd [#allocation6], 0
          %s191 = sshll.u32 %s1, 4
          %s192 = int_to_ptr.hbm [resolvable:$true] %s191
          %s193 = sshll.u32 [#allocation5], 4
          %s194 = int_to_ptr.vmem [resolvable:$true] %s193
          %196 = dma.hbm_to_vmem [thread:$0]  %s192, 16, %s194, [#allocation6]
        $region16: #{tpu_custom_call.1} parent=11 // pred_fallthru
          _
        // Predicated region
        $region17: #{tpu_custom_call.1} parent=11 // pred_check
          %p197 = pneg %p100
        $region18: #{tpu_custom_call.1} parent=11 // pred_check_branch
          %199 = sbr.rel (%p197) target = $region20
        $region19: #{tpu_custom_call.1} parent=11 // pred_region
          _
        $region20: #{tpu_custom_call.1} parent=11 // pred_fallthru
          _
        // Predicated region
        $region21: #{tpu_custom_call.1} parent=11 // pred_check
          %p200 = pneg %p121
        $region22: #{tpu_custom_call.1} parent=11 // pred_check_branch
          %202 = sbr.rel (%p200) target = $region24
        $region23: #{tpu_custom_call.1} parent=11 // pred_region
          %204 = vsyncadd [#allocation6], 0
          %s205 = sshll.u32 %s3, 4
          %s206 = int_to_ptr.hbm [resolvable:$true] %s205
          %s207 = sshll.u32 [#allocation7], 4
          %s208 = int_to_ptr.vmem [resolvable:$true] %s207
          %213 = dma.hbm_to_vmem [thread:$0]  %s206, 512, %s208, [#allocation6], 128, 128, 8
        $region24: #{tpu_custom_call.1} parent=11 // pred_fallthru
          _
        // Predicated region
        $region25: #{tpu_custom_call.1} parent=11 // pred_check
          %p214 = pneg %p142
        $region26: #{tpu_custom_call.1} parent=11 // pred_check_branch
          %216 = sbr.rel (%p214) target = $region28
        $region27: #{tpu_custom_call.1} parent=11 // pred_region
          _
        $region28: #{tpu_custom_call.1} parent=11 // pred_fallthru
          _
      $region12: #{tpu_custom_call.1} parent=5 // pred_fallthru
        _
      %p217 = scmp.lt.s32.totalorder %s18, 4
      // Predicated region
      $region29: #{tpu_custom_call.1} parent=5 // pred_check
        %p218 = pneg %p217
      $region30: #{tpu_custom_call.1} parent=5 // pred_check_branch
        %220 = sbr.rel (%p218) target = $region32
      $region31: #{tpu_custom_call.1} parent=5 // pred_region
        // Predicated region
        $region33: #{tpu_custom_call.1} parent=31 // pred_check
          %p221 = pneg %p52
        $region34: #{tpu_custom_call.1} parent=31 // pred_check_branch
          %223 = sbr.rel (%p221) target = $region36
        $region35: #{tpu_custom_call.1} parent=31 // pred_region
          %s224 = sand.u32 %s42, 1
          %s225 = scalar_lea.sflag [#allocation3], %s224
          %s226 = sand.u32 %s42, 1
          %s227 = smul.addr %s226, 8
          %s228 = scalar_lea.vmem [#allocation2], %s227
          %230 = vsyncadd %s225, 0
          %s231 = smul.addr %s25, 2
          %s232 = sadd.s32 %s26, %s231
          %s233 = smul.addr %s232, 8
          %s234 = scalar_lea.hbm %s0, %s233
          %s236 = sshll.u32 %s234, 4
          %s237 = int_to_ptr.hbm [resolvable:$true] %s236
          %s238 = sshll.u32 %s228, 4
          %s239 = int_to_ptr.vmem [resolvable:$true] %s238
          %241 = dma.hbm_to_vmem [thread:$0]  %s237, 128, %s239, %s225
        $region36: #{tpu_custom_call.1} parent=31 // pred_fallthru
          _
      $region32: #{tpu_custom_call.1} parent=5 // pred_fallthru
        _
      %p242 = scmp.le.s32.totalorder 1, %s18
      %p243 = scmp.lt.s32.totalorder %s18, 5
      %p244 = pnand %p242, %p243
      %p245 = pneg %p244
      // Predicated region
      $region37: #{tpu_custom_call.1} parent=5 // pred_check
        _
      $region38: #{tpu_custom_call.1} parent=5 // pred_check_branch
        %247 = sbr.rel (%p244) target = $region40
      $region39: #{tpu_custom_call.1} parent=5 // pred_region
        %s248 = ssub.s32 %s18, 1
        %s249 = sand.u32 %s45, 1
        %s250 = scalar_lea.sflag [#allocation3], %s249
        %s251 = sand.u32 %s45, 1
        %s252 = smul.addr %s251, 8
        %s253 = scalar_lea.vmem [#allocation2], %s252
        // Predicated region
        $region41: #{tpu_custom_call.1} parent=39 // pred_check
          %p254 = pneg %p58
        $region42: #{tpu_custom_call.1} parent=39 // pred_check_branch
          %256 = sbr.rel (%p254) target = $region44
        $region43: #{tpu_custom_call.1} parent=39 // pred_region
          %258 = dma.done %s250, 128
        $region44: #{tpu_custom_call.1} parent=39 // pred_fallthru
          _
        // Predicated region
        $region45: #{tpu_custom_call.1} parent=39 // pred_check
          %p259 = pneg %p79
        $region46: #{tpu_custom_call.1} parent=39 // pred_check_branch
          %261 = sbr.rel (%p259) target = $region48
        $region47: #{tpu_custom_call.1} parent=39 // pred_region
          %263 = dma.done [#allocation6], 16
        $region48: #{tpu_custom_call.1} parent=39 // pred_fallthru
          _
        // Predicated region
        $region49: #{tpu_custom_call.1} parent=39 // pred_check
          %p264 = pneg %p121
        $region50: #{tpu_custom_call.1} parent=39 // pred_check_branch
          %266 = sbr.rel (%p264) target = $region52
        $region51: #{tpu_custom_call.1} parent=39 // pred_region
          %268 = dma.done [#allocation6], 512
        $region52: #{tpu_custom_call.1} parent=39 // pred_fallthru
          _
        %s269 = sand.u32 %s45, 1
        %s270 = scalar_lea.sflag [#allocation3], %s269
        %s271 = sand.u32 %s45, 1
        %s272 = smul.addr %s271, 8
        %s273 = scalar_lea.vmem [#allocation2], %s272
        %p274 = pneg %p58
        %p275 = pneg %p55
        %p276 = pneg %p79
        %p277 = pneg %p76
        %p278 = pneg %p100
        %p279 = pneg %p97
        %p280 = pneg %p121
        %p281 = pneg %p118
        %p282 = pneg %p142
        %p283 = pneg %p139
        %p284 = pneg %p170
        %p285 = pneg %p167
        %s286 = sand.u32 %s157, 1
        %s287 = scalar_lea.sflag [#allocation4], %s286
        %s288 = sand.u32 %s157, 1
        %s289 = smul.addr %s288, 8
        %s290 = scalar_lea.vmem [#allocation8], %s289
        %v291 = vld [vmem:[%s253] sm:$0xff]
        %v292 = vld [vmem:[#allocation5] sm:$0x1]
        %v293 = vld [vmem:[%s2] sm:$0x1]
        %vm294 = vcmask 261120
        %v295 = vsel %vm294, %v291, 0.0
        %296 = vadd.xlane.f32.xlu0 %v295
        %v297 = vpop.xlane.xlu0 %296
        %v298 = vrcp.pop 32.0
        %v299 = vmul.f32 32.0, %v298
        %v300 = vsub.f32 1.0, %v299
        %v301 = vmul.f32 %v298, %v300
        %v302 = vadd.f32 %v298, %v301
        %vm303 = vweird.f32 %v298
        %v304 = vsel %vm303, %v298, %v302
        %v305 = vmul.f32 %v297, %v304
        %v306 = vsub.f32 %v291, %v305
        %v307 = vmul.f32 %v306, %v306
        %v308 = vsel %vm294, %v307, 0.0
        %309 = vadd.xlane.f32.xlu0 %v308
        %v310 = vpop.xlane.xlu0 %309
        %v311 = vmul.f32 %v310, %v304
        %v312 = vadd.f32 %v311, 1e-05
        %v313 = vrsqrt.pop %v312
        %v314 = vmul.f32 %v313, %v312
        %v315 = vmul.f32 %v314, %v313
        %v316 = vmul.f32 0.5, %v315
        %v317 = vsub.f32 1.5, %v316
        %v318 = vmul.f32 %v313, %v317
        %vm319 = vweird.f32 %v312
        %vm320 = vweird.f32 %v313
        %vm321 = vmor %vm319, %vm320
        %v322 = vsel %vm321, %v313, %v318
        %v323 = vmul.f32 %v306, %v322
        %v325 = vperm.slane %v292, 0
        %v327 = vmul.f32 %v323, %v325
        %v329 = vperm.slane %v293, 0
        %v331 = vadd.f32 %v327, %v329
        %v332 = vld [vmem:[#allocation7] sm:$0xff]
        %v333 = vld [vmem:[#allocation7 + $0x8] sm:$0xff]
        %v334 = vld [vmem:[#allocation7 + $0x10] sm:$0xff]
        %v335 = vld [vmem:[#allocation7 + $0x18] sm:$0xff]
        %v336 = vld [vmem:[%s4] sm:$0x1]
        %v338 = vperm.slane %v336, 0
        %v341 = vsel %vm294, %v331, 0
        %343 = vmatpush.msra.mxu0 0.0
        %344 = vmatpush.msra.mxu0 0.0
        %345 = vmatpush.msra.mxu0 0.0
        %346 = vmatpush.msra.mxu0 0.0
        %347 = vmatpush.msra.mxu0 0.0
        %348 = vmatpush.msra.mxu0 0.0
        %349 = vmatpush.msra.mxu0 0.0
        %350 = vmatpush.msra.mxu0 0.0
        %351 = vmatpush.msra.mxu0 0.0
        %352 = vmatpush.msra.mxu0 0.0
        %353 = vmatpush.msra.mxu0 0.0
        %354 = vmatpush.msra.mxu0 0.0
        %355 = vmatpush.msra.mxu0 %v335
        %356 = vmatpush.msra.mxu0 %v334
        %357 = vmatpush.msra.mxu0 %v333
        %358 = vmatpush.msra.mxu0 %v332
        %359 = vmatmul.f32.gmra.mxu0 %v341
        %v360 = vpop.f32.mrf.mxu0
        %v361 = vadd.f32 %v338, %v360
        %362 = vdwg.mxu0
        %vm363 = vcmask 785408
        %364 = vst.msk [vmem:[%s290] sm:$0xff] %vm363, %v361
        %s365 = sand.u32 %s157, 1
        %s366 = scalar_lea.sflag [#allocation4], %s365
        %s367 = sand.u32 %s157, 1
        %s368 = smul.addr %s367, 8
        %s369 = scalar_lea.vmem [#allocation8], %s368
        // Predicated region
        $region53: #{tpu_custom_call.1} parent=39 // pred_check
          %p370 = pneg %p167
        $region54: #{tpu_custom_call.1} parent=39 // pred_check_branch
          %372 = sbr.rel (%p370) target = $region56
        $region55: #{tpu_custom_call.1} parent=39 // pred_region
          %374 = vsyncadd %s366, 0
          %s375 = smul.addr %s27, 2
          %s376 = sadd.s32 %s28, %s375
          %s377 = smul.addr %s376, 8
          %s378 = scalar_lea.hbm %s5, %s377
          %s380 = sshll.u32 %s369, 4
          %s381 = int_to_ptr.vmem [resolvable:$true] %s380
          %s382 = sshll.u32 %s378, 4
          %s383 = int_to_ptr.hbm [resolvable:$true] %s382
          %385 = dma.vmem_to_hbm [thread:$0]  %s381, 128, %s383, %s366
        $region56: #{tpu_custom_call.1} parent=39 // pred_fallthru
          _
      $region40: #{tpu_custom_call.1} parent=5 // pred_fallthru
        _
      %p386 = scmp.le.s32.totalorder 2, %s18
      // Predicated region
      $region57: #{tpu_custom_call.1} parent=5 // pred_check
        %p387 = pneg %p386
      $region58: #{tpu_custom_call.1} parent=5 // pred_check_branch
        %389 = sbr.rel (%p387) target = $region60
      $region59: #{tpu_custom_call.1} parent=5 // pred_region
        %s390 = ssub.s32 %s18, 2
        // Predicated region
        $region61: #{tpu_custom_call.1} parent=59 // pred_check
          %p391 = pneg %p173
        $region62: #{tpu_custom_call.1} parent=59 // pred_check_branch
          %393 = sbr.rel (%p391) target = $region64
        $region63: #{tpu_custom_call.1} parent=59 // pred_region
          %s394 = sand.u32 %s158, 1
          %s395 = scalar_lea.sflag [#allocation4], %s394
          %s396 = sand.u32 %s158, 1
          %s397 = smul.addr %s396, 8
          %s398 = scalar_lea.vmem [#allocation8], %s397
          %400 = dma.done %s395, 128
        $region64: #{tpu_custom_call.1} parent=59 // pred_fallthru
          _
      $region60: #{tpu_custom_call.1} parent=5 // pred_fallthru
        _
    $region6: #{tpu_custom_call.1} parent=1 // loop_footer
      %s22 = sadd.s32 1, %s18
    $region7: #{tpu_custom_call.1} parent=1 // loop_footer_branch
      %17 = sbr.rel target = $region3
    $region8: #{tpu_custom_call.1} parent=1 // loop_exit
      _
    %401 = vsyncpa [#allocation3], 1
    %s402 = scalar_lea.sflag [#allocation3], 1
    %403 = vsyncpa %s402, 1
    %404 = vsyncpa [#allocation6], 1
    %405 = vsyncpa [#allocation4], 1
    %s406 = scalar_lea.sflag [#allocation4], 1
    %407 = vsyncpa %s406, 1

</llo_original>
